<compile_context>
chip_gen: v6e
topology: v6e:2x2x1
jax: 0.10.0
libtpu: 0.0.40
codegen_flags: <defaults>
</compile_context>

<pallas_src>
import functools
import math

import jax
import jax.numpy as jnp
from jax.experimental import pallas as pl
from jax.experimental.pallas import tpu as pltpu


def _uniform_crop_offsets(height, width, size, spatial_idx):
    """Exactly mirrors uniform_crop()'s offset logic (scale_size=None)."""
    assert spatial_idx in (0, 1, 2)
    y_offset = int(math.ceil((height - size) / 2))
    x_offset = int(math.ceil((width - size) / 2))
    if height > width:
        if spatial_idx == 0:
            y_offset = 0
        elif spatial_idx == 2:
            y_offset = height - size
    else:
        if spatial_idx == 0:
            x_offset = 0
        elif spatial_idx == 2:
            x_offset = width - size
    return y_offset, x_offset


def _spatial_crop_kernel(x_ref, *o_refs, crop_size, offsets):
    # x_ref : VMEM (TN, H, W) block of flattened frames (fetched from HBM once).
    # o_refs: num_crops VMEM (TN, crop, crop) output blocks.
    # offsets are compile-time Python ints -> each crop is one static,
    # fully vectorized slice copy (no dynamic lane slicing, no SMEM loads).
    for o_ref, (y0, x0) in zip(o_refs, offsets):
        o_ref[...] = x_ref[:, y0:y0 + crop_size, x0:x0 + crop_size]


def _pick_tile(n, h, w, num_crops, crop_size, itemsize):
    """Largest divisor of n (capped at 32) whose double-buffered blocks fit a
    conservative VMEM budget (safe for v7x's 64 MiB physical VMEM)."""
    bytes_per_frame = (h * w + num_crops * crop_size * crop_size) * itemsize
    budget = 24 * 1024 * 1024  # single-buffer budget; x2 (double buffer) < 64 MiB
    cap = max(1, min(32, budget // max(1, 2 * bytes_per_frame)))
    cap = min(cap, n)
    for d in range(cap, 0, -1):
        if n % d == 0:
            return d
    return 1


@functools.lru_cache(maxsize=None)
def _build_spatial_crop_call(shape, dtype_str, crop_size, crops_to_ext):
    """Build (and cache) the pallas_call for one video shape / crop config."""
    C, T, H, W = shape
    assert H >= crop_size and W >= crop_size, "video too small for crop_size"
    N = C * T
    num_crops = len(crops_to_ext)
    dtype = jnp.dtype(dtype_str)
    itemsize = dtype.itemsize

    # Compile-time offsets (exact uniform_crop logic).
    offsets = tuple(_uniform_crop_offsets(H, W, crop_size, idx)
                    for idx in crops_to_ext)

    TN = _pick_tile(N, H, W, num_crops, crop_size, itemsize)

    # Raise the scoped-VMEM limit when blocks are large (v5e/v6e default is
    # only 16/32 MiB); never request more than v7x's 64 MiB physical VMEM.
    per_step_bytes = 2 * TN * (H * W + num_crops * crop_size * crop_size) * itemsize
    vmem_limit = min(64 * 1024 * 1024,
                     max(32 * 1024 * 1024, int(per_step_bytes * 1.25) + (1 << 20)))

    kernel = functools.partial(_spatial_crop_kernel,
                               crop_size=crop_size, offsets=offsets)

    return pl.pallas_call(
        kernel,
        out_shape=tuple(
            jax.ShapeDtypeStruct((N, crop_size, crop_size), dtype)
            for _ in range(num_crops)),
        grid=(N // TN,),
        in_specs=[pl.BlockSpec((TN, H, W), lambda n: (n, 0, 0))],
        out_specs=tuple(
            pl.BlockSpec((TN, crop_size, crop_size), lambda n: (n, 0, 0))
            for _ in range(num_crops)),
        compiler_params=pltpu.CompilerParams(
            dimension_semantics=("parallel",),
            vmem_limit_bytes=vmem_limit,
        ),
    )


def spatial_crop_pallas(video, crop_size, crops_to_ext):
    """Crop one (C, T, H, W) video into len(crops_to_ext) (C, T, crop, crop) videos."""
    C, T, H, W = video.shape
    call = _build_spatial_crop_call((C, T, H, W), str(video.dtype),
                                    crop_size, tuple(crops_to_ext))
    x = video.reshape(C * T, H, W)
    outs = call(x)
    # Leading-dim reshape of a contiguous array: free (no extra HBM copy).
    return [o.reshape(C, T, crop_size, crop_size) for o in outs]


class SpatialCropJAX:
    """JAX/Pallas equivalent of SpatialCrop. No parameters (pure cropping)."""

    def __init__(self, crop_size: int = 224, num_crops: int = 3):
        self.crop_size = crop_size
        if num_crops == 3:
            self.crops_to_ext = [0, 1, 2]
            self.flipped_crops_to_ext = []
        elif num_crops == 1:
            self.crops_to_ext = [1]
            self.flipped_crops_to_ext = []
        else:
            raise NotImplementedError("Nothing else supported yet")
        # TODO(synk): flipped_crops_to_ext path is unused for num_crops in {1,3},
        # so hflip is not implemented here.

    def __call__(self, videos):
        assert isinstance(videos, list), "Must be a list of videos after temporal crops"
        assert all(v.ndim == 4 for v in videos), "Must be (C,T,H,W)"
        res = []
        for video in videos:
            res.extend(spatial_crop_pallas(video, self.crop_size, self.crops_to_ext))
        return res


def _reference_crop(video, crop_size, spatial_idx):
    H, W = video.shape[2], video.shape[3]
    y_off, x_off = _uniform_crop_offsets(H, W, crop_size, spatial_idx)
    return video[:, :, y_off:y_off + crop_size, x_off:x_off + crop_size]


if __name__ == "__main__":
    key = jax.random.PRNGKey(0)
    k1, k2 = jax.random.split(key)

    # small shapes consistent with the module: videos are (C, T, H, W)
    C, T, H, W = 4, 2, 16, 16
    crop_size = 8
    videos = [
        jax.random.normal(k1, (C, T, H, W), dtype=jnp.float32),
        jax.random.normal(k2, (C, T, H, W), dtype=jnp.float32),
    ]

    module = SpatialCropJAX(crop_size=crop_size, num_crops=3)
    out = module(videos)
    out = jax.block_until_ready(out)

    assert len(out) == 3 * len(videos)
    # verify against plain-JAX reference slicing
    i = 0
    for video in videos:
        for spatial_idx in module.crops_to_ext:
            ref = _reference_crop(video, crop_size, spatial_idx)
            assert out[i].shape == (C, T, crop_size, crop_size)
            assert jnp.allclose(out[i], ref), f"mismatch at output {i}"
            i += 1

    print("KERNEL_OK")
</pallas_src>

<mosaic_0001>
module attributes {stable_mosaic.version = 11 : i64} {
  func.func @_spatial_crop_kernel(%arg0: i32, %arg1: memref<8x16x16xf32, #tpu.memory_space<vmem>>, %arg2: memref<8x8x8xf32, #tpu.memory_space<vmem>>, %arg3: memref<8x8x8xf32, #tpu.memory_space<vmem>>, %arg4: memref<8x8x8xf32, #tpu.memory_space<vmem>>) attributes {dimension_semantics = [#tpu.dimension_semantics<parallel>], iteration_bounds = array<i64: 1>, scalar_prefetch = 0 : i64, scratch_operands = 0 : i64, tpu.core_type = #tpu.core_type<tc>, window_params = [{transform_indices = @transform_0, window_bounds = array<i64: 8, 16, 16>}, {transform_indices = @transform_1, window_bounds = array<i64: 8, 8, 8>}, {transform_indices = @transform_2, window_bounds = array<i64: 8, 8, 8>}, {transform_indices = @transform_3, window_bounds = array<i64: 8, 8, 8>}]} {
    %c0 = arith.constant 0 : index
    %c4 = arith.constant 4 : index
    %c0_0 = arith.constant 0 : index
    %0 = vector.load %arg1[%c0, %c4, %c0_0] : memref<8x16x16xf32, #tpu.memory_space<vmem>>, vector<8x8x8xf32>
    %c0_1 = arith.constant 0 : index
    %c0_2 = arith.constant 0 : index
    %c0_3 = arith.constant 0 : index
    %1 = vector.load %arg2[%c0_1, %c0_2, %c0_3] : memref<8x8x8xf32, #tpu.memory_space<vmem>>, vector<8x8x8xf32>
    tpu.vector_store %arg2[%c0_1, %c0_2, %c0_3], %0 {strides = array<i32>} : memref<8x8x8xf32, #tpu.memory_space<vmem>>, vector<8x8x8xf32>,
    %c0_4 = arith.constant 0 : index
    %c4_5 = arith.constant 4 : index
    %c4_6 = arith.constant 4 : index
    %2 = vector.load %arg1[%c0_4, %c4_5, %c4_6] : memref<8x16x16xf32, #tpu.memory_space<vmem>>, vector<8x8x8xf32>
    %c0_7 = arith.constant 0 : index
    %c0_8 = arith.constant 0 : index
    %c0_9 = arith.constant 0 : index
    %3 = vector.load %arg3[%c0_7, %c0_8, %c0_9] : memref<8x8x8xf32, #tpu.memory_space<vmem>>, vector<8x8x8xf32>
    tpu.vector_store %arg3[%c0_7, %c0_8, %c0_9], %2 {strides = array<i32>} : memref<8x8x8xf32, #tpu.memory_space<vmem>>, vector<8x8x8xf32>,
    %c0_10 = arith.constant 0 : index
    %c4_11 = arith.constant 4 : index
    %c8 = arith.constant 8 : index
    %4 = vector.load %arg1[%c0_10, %c4_11, %c8] : memref<8x16x16xf32, #tpu.memory_space<vmem>>, vector<8x8x8xf32>
    %c0_12 = arith.constant 0 : index
    %c0_13 = arith.constant 0 : index
    %c0_14 = arith.constant 0 : index
    %5 = vector.load %arg4[%c0_12, %c0_13, %c0_14] : memref<8x8x8xf32, #tpu.memory_space<vmem>>, vector<8x8x8xf32>
    tpu.vector_store %arg4[%c0_12, %c0_13, %c0_14], %4 {strides = array<i32>} : memref<8x8x8xf32, #tpu.memory_space<vmem>>, vector<8x8x8xf32>,
    return
  }
  func.func @transform_0(%arg0: i32) -> (i32, i32, i32) {
    %c0_i32 = arith.constant 0 : i32
    %c0_i32_0 = arith.constant 0 : i32
    %c0_i32_1 = arith.constant 0 : i32
    return %arg0, %c0_i32, %c0_i32_0 : i32, i32, i32
  }
  func.func @transform_1(%arg0: i32) -> (i32, i32, i32) {
    %c0_i32 = arith.constant 0 : i32
    %c0_i32_0 = arith.constant 0 : i32
    %c0_i32_1 = arith.constant 0 : i32
    return %arg0, %c0_i32, %c0_i32_0 : i32, i32, i32
  }
  func.func @transform_2(%arg0: i32) -> (i32, i32, i32) {
    %c0_i32 = arith.constant 0 : i32
    %c0_i32_0 = arith.constant 0 : i32
    %c0_i32_1 = arith.constant 0 : i32
    return %arg0, %c0_i32, %c0_i32_0 : i32, i32, i32
  }
  func.func @transform_3(%arg0: i32) -> (i32, i32, i32) {
    %c0_i32 = arith.constant 0 : i32
    %c0_i32_0 = arith.constant 0 : i32
    %c0_i32_1 = arith.constant 0 : i32
    return %arg0, %c0_i32, %c0_i32_0 : i32, i32, i32
  }
}

</mosaic_0001>

<llo_original>
// kernel: tpu_custom_call.1
$region0: #{tpu_custom_call.1}
  #allocation0 [shape = 'u32[]', space=smem, size = 0x4, offset = 0x4, fixed_abs, tag = 'smem constant byte address 0x4 - core index']
  #allocation1 [shape = 'u32[144,128]{1,0:T(1,128)}', space=vmem, size = 0x12000, scoped, tag = 'internal scratch']
  %s0 = inlined_call_operand.hbm [shape: f32[8,16,16], index: 0, kind: input, shape index: {}]
  %s1 = inlined_call_operand.hbm [shape: f32[8,8,8], index: 1, kind: output, shape index: {0}]
  %s2 = inlined_call_operand.hbm [shape: f32[8,8,8], index: 2, kind: output, shape index: {1}]
  %s3 = inlined_call_operand.hbm [shape: f32[8,8,8], index: 3, kind: output, shape index: {2}]
  %4 = xla_tuple %s1, %s2, %s3
  %s5 = sld [smem:[#allocation0]]
  $region34: #{tpu_custom_call.1} parent=0
    _
  %s7 = ssub.s32 1, %s5
  %s8 = scalar_select 0, %s7, %s5
  $region1: #{tpu_custom_call.1} parent=0
    #allocation2 [shape = 'u8[65536]{0}', space=vmem, size = 0x10000, scoped, tag = 'input window, operand 0, single buffered']
    #allocation3 [shape = 's32[1]{0}', space=sflag, size = 0x4, scoped, tag = 'scoped memory for tpu_custom_call.1']
    #allocation4 [shape = 's32[1]{0}', space=sflag, size = 0x4, scoped, tag = 'scoped memory for tpu_custom_call.1']
    #allocation5 [shape = 'u8[32768]{0}', space=vmem, size = 0x8000, scoped, tag = 'output window, operand 0, single buffered']
    #allocation6 [shape = 'u8[32768]{0}', space=vmem, size = 0x8000, scoped, tag = 'output window, operand 1, single buffered']
    #allocation7 [shape = 's32[1]{0}', space=sflag, size = 0x4, scoped, tag = 'scoped memory for tpu_custom_call.1']
    #allocation8 [shape = 'u8[32768]{0}', space=vmem, size = 0x8000, scoped, tag = 'output window, operand 2, single buffered']
    %9 = vsyncpa [#allocation3], 0
    %10 = vsyncpa [#allocation4], 0
    %11 = vsyncpa [#allocation7], 0
    // Predicated region
    $region2: #{tpu_custom_call.1} parent=1 // pred_check
      _
    $region3: #{tpu_custom_call.1} parent=1 // pred_check_branch
      %13 = sbr.rel (0) target = $region5
    $region4: #{tpu_custom_call.1} parent=1 // pred_region
      %s15 = ssub.s32 2048, 2048
      %16 = vsyncadd [#allocation3], %s15
      %s17 = sshll.u32 [#allocation2], 4
      %s18 = int_to_ptr.vmem [resolvable:$true] %s17
      %23 = dma.hbm_to_vmem [thread:$0]  %s0, 2048, %s18, [#allocation3], 128, 128, 8
    $region5: #{tpu_custom_call.1} parent=1 // pred_fallthru
      _
    // Predicated region
    $region6: #{tpu_custom_call.1} parent=1 // pred_check
      _
    $region7: #{tpu_custom_call.1} parent=1 // pred_check_branch
      %25 = sbr.rel (0) target = $region9
    $region8: #{tpu_custom_call.1} parent=1 // pred_region
      %26 = dma.done [#allocation3], 2048
    $region9: #{tpu_custom_call.1} parent=1 // pred_fallthru
      _
    %v27 = vld [vmem:[#allocation2 + $0x4] sm:$0xff]
    %v28 = vld [vmem:[#allocation2 + $0x14] sm:$0xff]
    %v29 = vld [vmem:[#allocation2 + $0x24] sm:$0xff]
    %v30 = vld [vmem:[#allocation2 + $0x34] sm:$0xff]
    %v31 = vld [vmem:[#allocation2 + $0x44] sm:$0xff]
    %v32 = vld [vmem:[#allocation2 + $0x54] sm:$0xff]
    %v33 = vld [vmem:[#allocation2 + $0x64] sm:$0xff]
    %v34 = vld [vmem:[#allocation2 + $0x74] sm:$0xff]
    %vm35 = vcmask 64512
    %36 = vst.msk [vmem:[#allocation5] sm:$0xff] %vm35, %v27
    %37 = vst.msk [vmem:[#allocation5 + $0x8] sm:$0xff] %vm35, %v28
    %38 = vst.msk [vmem:[#allocation5 + $0x10] sm:$0xff] %vm35, %v29
    %39 = vst.msk [vmem:[#allocation5 + $0x18] sm:$0xff] %vm35, %v30
    %40 = vst.msk [vmem:[#allocation5 + $0x20] sm:$0xff] %vm35, %v31
    %41 = vst.msk [vmem:[#allocation5 + $0x28] sm:$0xff] %vm35, %v32
    %42 = vst.msk [vmem:[#allocation5 + $0x30] sm:$0xff] %vm35, %v33
    %43 = vst.msk [vmem:[#allocation5 + $0x38] sm:$0xff] %vm35, %v34
    %v44 = vld [vmem:[#allocation2 + $0x4] sm:$0xff]
    %v45 = vld [vmem:[#allocation2 + $0x14] sm:$0xff]
    %v46 = vld [vmem:[#allocation2 + $0x24] sm:$0xff]
    %v47 = vld [vmem:[#allocation2 + $0x34] sm:$0xff]
    %v48 = vld [vmem:[#allocation2 + $0x44] sm:$0xff]
    %v49 = vld [vmem:[#allocation2 + $0x54] sm:$0xff]
    %v50 = vld [vmem:[#allocation2 + $0x64] sm:$0xff]
    %v51 = vld [vmem:[#allocation2 + $0x74] sm:$0xff]
    %60 = vrot.lane.b32.xlu0 %v44, 124
    %v61 = vpop.permute.xlu0 %60
    %62 = vrot.lane.b32.xlu0 %v45, 124
    %v63 = vpop.permute.xlu0 %62
    %64 = vrot.lane.b32.xlu0 %v46, 124
    %v65 = vpop.permute.xlu0 %64
    %66 = vrot.lane.b32.xlu0 %v47, 124
    %v67 = vpop.permute.xlu0 %66
    %68 = vrot.lane.b32.xlu0 %v48, 124
    %v69 = vpop.permute.xlu0 %68
    %70 = vrot.lane.b32.xlu0 %v49, 124
    %v71 = vpop.permute.xlu0 %70
    %72 = vrot.lane.b32.xlu0 %v50, 124
    %v73 = vpop.permute.xlu0 %72
    %74 = vrot.lane.b32.xlu0 %v51, 124
    %v75 = vpop.permute.xlu0 %74
    %84 = vst.msk [vmem:[#allocation6] sm:$0xff] %vm35, %v61
    %85 = vst.msk [vmem:[#allocation6 + $0x8] sm:$0xff] %vm35, %v63
    %86 = vst.msk [vmem:[#allocation6 + $0x10] sm:$0xff] %vm35, %v65
    %87 = vst.msk [vmem:[#allocation6 + $0x18] sm:$0xff] %vm35, %v67
    %88 = vst.msk [vmem:[#allocation6 + $0x20] sm:$0xff] %vm35, %v69
    %89 = vst.msk [vmem:[#allocation6 + $0x28] sm:$0xff] %vm35, %v71
    %90 = vst.msk [vmem:[#allocation6 + $0x30] sm:$0xff] %vm35, %v73
    %91 = vst.msk [vmem:[#allocation6 + $0x38] sm:$0xff] %vm35, %v75
    %v92 = vld [vmem:[#allocation2 + $0x4] sm:$0xff]
    %v93 = vld [vmem:[#allocation2 + $0x14] sm:$0xff]
    %v94 = vld [vmem:[#allocation2 + $0x24] sm:$0xff]
    %v95 = vld [vmem:[#allocation2 + $0x34] sm:$0xff]
    %v96 = vld [vmem:[#allocation2 + $0x44] sm:$0xff]
    %v97 = vld [vmem:[#allocation2 + $0x54] sm:$0xff]
    %v98 = vld [vmem:[#allocation2 + $0x64] sm:$0xff]
    %v99 = vld [vmem:[#allocation2 + $0x74] sm:$0xff]
    %108 = vrot.lane.b32.xlu0 %v92, 120
    %v109 = vpop.permute.xlu0 %108
    %110 = vrot.lane.b32.xlu0 %v93, 120
    %v111 = vpop.permute.xlu0 %110
    %112 = vrot.lane.b32.xlu0 %v94, 120
    %v113 = vpop.permute.xlu0 %112
    %114 = vrot.lane.b32.xlu0 %v95, 120
    %v115 = vpop.permute.xlu0 %114
    %116 = vrot.lane.b32.xlu0 %v96, 120
    %v117 = vpop.permute.xlu0 %116
    %118 = vrot.lane.b32.xlu0 %v97, 120
    %v119 = vpop.permute.xlu0 %118
    %120 = vrot.lane.b32.xlu0 %v98, 120
    %v121 = vpop.permute.xlu0 %120
    %122 = vrot.lane.b32.xlu0 %v99, 120
    %v123 = vpop.permute.xlu0 %122
    %132 = vst.msk [vmem:[#allocation8] sm:$0xff] %vm35, %v109
    %133 = vst.msk [vmem:[#allocation8 + $0x8] sm:$0xff] %vm35, %v111
    %134 = vst.msk [vmem:[#allocation8 + $0x10] sm:$0xff] %vm35, %v113
    %135 = vst.msk [vmem:[#allocation8 + $0x18] sm:$0xff] %vm35, %v115
    %136 = vst.msk [vmem:[#allocation8 + $0x20] sm:$0xff] %vm35, %v117
    %137 = vst.msk [vmem:[#allocation8 + $0x28] sm:$0xff] %vm35, %v119
    %138 = vst.msk [vmem:[#allocation8 + $0x30] sm:$0xff] %vm35, %v121
    %139 = vst.msk [vmem:[#allocation8 + $0x38] sm:$0xff] %vm35, %v123
    // Predicated region
    $region10: #{tpu_custom_call.1} parent=1 // pred_check
      _
    $region11: #{tpu_custom_call.1} parent=1 // pred_check_branch
      %141 = sbr.rel (0) target = $region13
    $region12: #{tpu_custom_call.1} parent=1 // pred_region
      %s143 = ssub.s32 1024, 1024
      %144 = vsyncadd [#allocation4], %s143
      %s145 = sshll.u32 [#allocation5], 4
      %s146 = int_to_ptr.vmem [resolvable:$true] %s145
      %151 = dma.vmem_to_hbm [thread:$0]  %s146, 1024, %s1, [#allocation4], 128, 128, 8
    $region13: #{tpu_custom_call.1} parent=1 // pred_fallthru
      _
    // Predicated region
    $region14: #{tpu_custom_call.1} parent=1 // pred_check
      _
    $region15: #{tpu_custom_call.1} parent=1 // pred_check_branch
      %153 = sbr.rel (0) target = $region17
    $region16: #{tpu_custom_call.1} parent=1 // pred_region
      %s155 = ssub.s32 1024, 1024
      %156 = vsyncadd [#allocation7], %s155
      %s157 = sshll.u32 [#allocation6], 4
      %s158 = int_to_ptr.vmem [resolvable:$true] %s157
      %163 = dma.vmem_to_hbm [thread:$0]  %s158, 1024, %s2, [#allocation7], 128, 128, 8
    $region17: #{tpu_custom_call.1} parent=1 // pred_fallthru
      _
    // Predicated region
    $region18: #{tpu_custom_call.1} parent=1 // pred_check
      _
    $region19: #{tpu_custom_call.1} parent=1 // pred_check_branch
      %165 = sbr.rel (0) target = $region21
    $region20: #{tpu_custom_call.1} parent=1 // pred_region
      %s167 = ssub.s32 1024, 1024
      %168 = vsyncadd [#allocation7], %s167
      %s169 = sshll.u32 [#allocation8], 4
      %s170 = int_to_ptr.vmem [resolvable:$true] %s169
      %175 = dma.vmem_to_hbm [thread:$0]  %s170, 1024, %s3, [#allocation7], 128, 128, 8
    $region21: #{tpu_custom_call.1} parent=1 // pred_fallthru
      _
    // Predicated region
    $region22: #{tpu_custom_call.1} parent=1 // pred_check
      _
    $region23: #{tpu_custom_call.1} parent=1 // pred_check_branch
      %177 = sbr.rel (0) target = $region25
    $region24: #{tpu_custom_call.1} parent=1 // pred_region
      %178 = dma.done [#allocation4], 1024
    $region25: #{tpu_custom_call.1} parent=1 // pred_fallthru
      _
    // Predicated region
    $region26: #{tpu_custom_call.1} parent=1 // pred_check
      _
    $region27: #{tpu_custom_call.1} parent=1 // pred_check_branch
      %180 = sbr.rel (0) target = $region29
    $region28: #{tpu_custom_call.1} parent=1 // pred_region
      %181 = dma.done [#allocation7], 1024
    $region29: #{tpu_custom_call.1} parent=1 // pred_fallthru
      _
    // Predicated region
    $region30: #{tpu_custom_call.1} parent=1 // pred_check
      _
    $region31: #{tpu_custom_call.1} parent=1 // pred_check_branch
      %183 = sbr.rel (0) target = $region33
    $region32: #{tpu_custom_call.1} parent=1 // pred_region
      %184 = dma.done [#allocation7], 1024
    $region33: #{tpu_custom_call.1} parent=1 // pred_fallthru
      _
    %185 = vsyncpa [#allocation3], 1
    %186 = vsyncpa [#allocation4], 1
    %187 = vsyncpa [#allocation7], 1

</llo_original>
